<compile_context>
chip_gen: v7x
topology: tpu7x:2x2x1
jax: 0.10.0
libtpu: 0.0.40
codegen_flags: <defaults>
</compile_context>

<pallas_src>
import jax
import jax.numpy as jnp
from jax.experimental import pallas as pl
from jax.experimental.pallas import tpu as pltpu


def _make_distance_kernel(u):
    """Kernel processing gb = gpb*u graphs per grid step.

    Refs:
      x_ref:    (gb, M, D)    f32  dense node embeddings
      mrow_ref: (gb, 1, M)    f32  validity mask (1.0 = real node, 0.0 = padding)
      dm_ref:   (gpb, M, u*M) f32  lane-packed distance row-blocks (u graphs each)
      mext_ref: (gpb, M, u*M) i8   lane-packed mask outer products
    """
    def kernel(x_ref, mrow_ref, dm_ref, mext_ref):
        gpb = dm_ref.shape[0]

        def group_body(grp, carry):
            d_tiles = []
            m_tiles = []
            for j in range(u):                       # static: lane packing within a row-block
                g = grp * u + j                      # dynamic first-axis index
                xg = x_ref[g]                        # (M, D)
                # Exact difference formulation: no gram-identity cancellation,
                # diagonal is exactly zero (matches torch.cdist's direct path).
                diff = xg[:, None, :] - xg[None, :, :]          # (M, M, D)
                d_tiles.append(jnp.sqrt(jnp.sum(diff * diff, axis=-1)))
                mr = mrow_ref[g]                     # (1, M)
                m_tiles.append(jnp.transpose(mr) * mr)          # (M, M)
            dm_tile = d_tiles[0] if u == 1 else jnp.concatenate(d_tiles, axis=-1)
            m_tile = m_tiles[0] if u == 1 else jnp.concatenate(m_tiles, axis=-1)
            dm_ref[grp] = dm_tile
            mext_ref[grp] = m_tile.astype(jnp.int8)
            return carry

        jax.lax.fori_loop(0, gpb, group_body, 0, unroll=2 if gpb > 1 else 1)

    return kernel


def _vmem_capacity_bytes():
    try:
        return int(pltpu.get_tpu_info().vmem_capacity_bytes)
    except Exception:      # non-TPU backend / interpret mode / older API
        return 128 * 1024 * 1024


def _plan_tiling(B, M, D):
    """Pick (u, gb): graphs packed per lane row-block, graphs per grid step."""
    per_graph_bytes = M * M * (4 + 1) + M * (D + 1) * 4      # dm + mext + x + mask
    vmem_cap = _vmem_capacity_bytes()
    # Per-step byte target to amortize the ~0.35us/step pipeline overhead.
    # v7x-class parts (64 MiB VMEM/core, ~3.2 TB/s HBM) drain blocks faster.
    small_vmem = vmem_cap <= 80 * 1024 * 1024
    target_bytes = 6 * 1024 * 1024 if small_vmem else 3 * 1024 * 1024
    # Keep the double-buffered blocks well inside scoped VMEM.
    vmem_budget = min(vmem_cap // 4, 16 * 1024 * 1024)
    gb = max(1, min(B,
                    target_bytes // per_graph_bytes,
                    max(1, vmem_budget // (2 * per_graph_bytes))))
    if B >= 2:
        gb = min(gb, B // 2)       # >= 2 grid steps so both v7x TensorCores get work
    gb = max(1, gb)
    # Lane-packing factor: pack graphs along lanes until rows are ~128 lanes wide.
    u = max(1, min(128 // M, gb)) if M < 128 else 1
    gb = max(u, (gb // u) * u)     # gb must be a multiple of u
    # Prefer a gb (multiple of u) that divides B -> no padded fake graphs.
    cand = gb
    while cand >= max(u, gb // 2):
        if B % cand == 0:
            return u, cand
        cand -= u
    return u, gb


def distance_decoder_dense(x_dense, mask):
    """x_dense: [B,M,D] f32, mask: [B,M] bool -> (dm [B,M,M] f32, mask_ext [B,M,M] bool)."""
    B, M, D = x_dense.shape
    u, gb = _plan_tiling(B, M, D)
    gpb = gb // u

    Bp = ((B + gb - 1) // gb) * gb
    if Bp != B:
        x_dense = jnp.pad(x_dense, ((0, Bp - B), (0, 0), (0, 0)))
        mask = jnp.pad(mask, ((0, Bp - B), (0, 0)))
    mask_row = mask.astype(jnp.float32).reshape(Bp, 1, M)

    Gp = Bp // u                    # total lane-packed row-blocks
    grid = (Bp // gb,)

    # Double-buffered per-step VMEM use (inputs + outputs).
    per_graph_bytes = M * M * (4 + 1) + M * (D + 1) * 4
    block_bytes = 2 * gb * per_graph_bytes
    vmem_limit = None
    if block_bytes > 12 * 1024 * 1024:
        vmem_cap = _vmem_capacity_bytes()
        cap = 48 * 1024 * 1024 if vmem_cap <= 80 * 1024 * 1024 else 96 * 1024 * 1024
        vmem_limit = min(block_bytes + block_bytes // 2, cap)
    # TODO(synk): for very large M (>= ~1024) tile the MxM output over a
    # (B, M//tm, M//tn) grid and switch to a split-bf16 3-pass MXU gram so the
    # blocks fit v7x's 64 MiB VMEM and the VPU diff loop stops binding.

    dm_p, mext_p = pl.pallas_call(
        _make_distance_kernel(u),
        out_shape=(
            jax.ShapeDtypeStruct((Gp, M, u * M), jnp.float32),
            jax.ShapeDtypeStruct((Gp, M, u * M), jnp.int8),
        ),
        grid_spec=pltpu.PrefetchScalarGridSpec(
            num_scalar_prefetch=0,
            grid=grid,
            in_specs=[
                pl.BlockSpec((gb, M, D), lambda b: (b, 0, 0)),
                pl.BlockSpec((gb, 1, M), lambda b: (b, 0, 0)),
            ],
            out_specs=[
                pl.BlockSpec((gpb, M, u * M), lambda b: (b, 0, 0)),
                pl.BlockSpec((gpb, M, u * M), lambda b: (b, 0, 0)),
            ],
        ),
        compiler_params=pltpu.CompilerParams(
            dimension_semantics=("parallel",),
            vmem_limit_bytes=vmem_limit),
    )(x_dense, mask_row)

    if u > 1:
        # Unpack lane-packed row-blocks back to [B, M, M] (cheap reshape/transpose).
        dm = dm_p.reshape(Gp, M, u, M).transpose(0, 2, 1, 3).reshape(Bp, M, M)
        mext = mext_p.reshape(Gp, M, u, M).transpose(0, 2, 1, 3).reshape(Bp, M, M)
    else:
        dm, mext = dm_p, mext_p
    return dm[:B], mext[:B].astype(jnp.bool_)


# TODO(synk): torch_geometric.utils.to_dense_batch is a data-dependent
# ragged->dense scatter with no clean in-kernel Pallas equivalent; it is
# implemented as plain-JAX glue (batch assumed sorted, as in PyG).
def to_dense_batch(node_embeddings, batch, num_graphs, max_nodes):
    N, D = node_embeddings.shape
    counts = jax.ops.segment_sum(jnp.ones((N,), jnp.int32), batch,
                                 num_segments=num_graphs)
    starts = jnp.concatenate(
        [jnp.zeros((1,), jnp.int32), jnp.cumsum(counts)[:-1]])
    pos = jnp.arange(N, dtype=jnp.int32) - starts[batch]
    x_dense = jnp.zeros((num_graphs, max_nodes, D), node_embeddings.dtype)
    x_dense = x_dense.at[batch, pos].set(node_embeddings)
    mask = jnp.zeros((num_graphs, max_nodes), jnp.bool_).at[batch, pos].set(True)
    return x_dense, mask


def distance_decoder(node_embeddings, batch, num_graphs, max_nodes):
    x_dense, mask = to_dense_batch(node_embeddings, batch, num_graphs, max_nodes)
    return distance_decoder_dense(x_dense, mask)


def _build_batch(counts):
    return jnp.concatenate(
        [jnp.full((c,), i, dtype=jnp.int32) for i, c in enumerate(counts)])


def _reference(x_dense, mask):
    diff = x_dense[:, :, None, :] - x_dense[:, None, :, :]
    dm = jnp.sqrt(jnp.sum(diff * diff, axis=-1))
    mext = mask[:, :, None] & mask[:, None, :]
    return dm, mext


if __name__ == "__main__":
    key = jax.random.PRNGKey(0)
    D = 32

    cases = [
        ([5, 8], "2 graphs (module example shapes, gb=1 unpacked path)"),
        ([8, 5, 8, 3, 8, 6, 8, 7], "8 graphs (lane-packed output path)"),
        ([((7 * i) % 8) + 1 for i in range(64)],
         "64 graphs (packed path with in-kernel group loop)"),
    ]

    for case_idx, (counts, desc) in enumerate(cases):
        num_graphs = len(counts)
        max_nodes = max(counts)
        batch = _build_batch(counts)
        N = int(batch.shape[0])
        key, sub = jax.random.split(key)
        node_emb = jax.random.normal(sub, (N, D), dtype=jnp.float32)
        if case_idx == 0:
            # duplicate node inside graph 1: distance must be exactly zero
            node_emb = node_emb.at[6].set(node_emb[5])

        dm, mext = distance_decoder(node_emb, batch, num_graphs, max_nodes)
        jax.block_until_ready((dm, mext))

        x_dense, mask = to_dense_batch(node_emb, batch, num_graphs, max_nodes)
        dm_ref, mext_ref = _reference(x_dense, mask)

        assert dm.shape == (num_graphs, max_nodes, max_nodes), desc
        assert mext.shape == (num_graphs, max_nodes, max_nodes), desc
        assert mext.dtype == jnp.bool_, desc
        max_err = float(jnp.max(jnp.abs(dm - dm_ref)))
        assert jnp.allclose(dm, dm_ref, rtol=1e-4, atol=1e-4), (desc, max_err)
        assert bool(jnp.all(mext == mext_ref)), desc
        if case_idx == 0:
            assert float(dm[1, 0, 1]) == 0.0, "duplicate-node distance must be 0"

    print("KERNEL_OK")
</pallas_src>

<mosaic_0001>
module attributes {stable_mosaic.version = 11 : i64} {
  func.func @kernel(%arg0: i32, %arg1: memref<1x8x32xf32, #tpu.memory_space<vmem>>, %arg2: memref<1x1x8xf32, #tpu.memory_space<vmem>>, %arg3: memref<1x8x8xf32, #tpu.memory_space<vmem>>, %arg4: memref<1x8x8xi8, #tpu.memory_space<vmem>>) attributes {dimension_semantics = [#tpu.dimension_semantics<parallel>], iteration_bounds = array<i64: 2>, scalar_prefetch = 0 : i64, scratch_operands = 0 : i64, tpu.core_type = #tpu.core_type<tc>, window_params = [{transform_indices = @transform_0, window_bounds = array<i64: 1, 8, 32>}, {transform_indices = @transform_1, window_bounds = array<i64: 1, 1, 8>}, {transform_indices = @transform_2, window_bounds = array<i64: 1, 8, 8>}, {transform_indices = @transform_3, window_bounds = array<i64: 1, 8, 8>}]} {
    %c0_i32 = arith.constant 0 : i32
    %c1_i32 = arith.constant 1 : i32
    %0 = arith.muli %c0_i32, %c1_i32 : i32
    %c0_i32_0 = arith.constant 0 : i32
    %1 = arith.addi %0, %c0_i32_0 : i32
    %2 = arith.index_cast %1 : i32 to index
    %c0 = arith.constant 0 : index
    %c0_1 = arith.constant 0 : index
    %3 = vector.load %arg1[%2, %c0, %c0_1] : memref<1x8x32xf32, #tpu.memory_space<vmem>>, vector<1x8x32xf32>
    %4 = vector.shape_cast %3 : vector<1x8x32xf32> to vector<8x32xf32>
    %5 = vector.shape_cast %4 : vector<8x32xf32> to vector<8x1x32xf32>
    %6 = vector.shape_cast %4 : vector<8x32xf32> to vector<1x8x32xf32>
    %7 = vector.broadcast %5 : vector<8x1x32xf32> to vector<8x8x32xf32>
    %8 = vector.broadcast %6 : vector<1x8x32xf32> to vector<8x8x32xf32>
    %9 = arith.subf %7, %8 : vector<8x8x32xf32>
    %10 = arith.mulf %9, %9 : vector<8x8x32xf32>
    %cst = arith.constant dense<0.000000e+00> : vector<8x8xf32>
    %11 = vector.multi_reduction <add>, %10, %cst [2] : vector<8x8x32xf32> to vector<8x8xf32>
    %12 = math.sqrt %11 : vector<8x8xf32>
    %13 = arith.index_cast %1 : i32 to index
    %c0_2 = arith.constant 0 : index
    %c0_3 = arith.constant 0 : index
    %14 = vector.load %arg2[%13, %c0_2, %c0_3] : memref<1x1x8xf32, #tpu.memory_space<vmem>>, vector<1x1x8xf32>
    %15 = vector.shape_cast %14 : vector<1x1x8xf32> to vector<1x8xf32>
    %16 = tpu.transpose %15, [1, 0] : vector<1x8xf32> -> vector<8x1xf32>
    %17 = vector.broadcast %16 : vector<8x1xf32> to vector<8x8xf32>
    %18 = vector.broadcast %15 : vector<1x8xf32> to vector<8x8xf32>
    %19 = arith.mulf %17, %18 : vector<8x8xf32>
    %20 = arith.index_cast %c0_i32 : i32 to index
    %c0_4 = arith.constant 0 : index
    %c0_5 = arith.constant 0 : index
    %21 = vector.load %arg3[%20, %c0_4, %c0_5] : memref<1x8x8xf32, #tpu.memory_space<vmem>>, vector<1x8x8xf32>
    %22 = vector.shape_cast %21 : vector<1x8x8xf32> to vector<8x8xf32>
    %23 = vector.shape_cast %12 : vector<8x8xf32> to vector<1x8x8xf32>
    tpu.vector_store %arg3[%20, %c0_4, %c0_5], %23 {strides = array<i32>} : memref<1x8x8xf32, #tpu.memory_space<vmem>>, vector<1x8x8xf32>,
    %24 = arith.fptosi %19 : vector<8x8xf32> to vector<8x8xi8>
    %25 = arith.index_cast %c0_i32 : i32 to index
    %c0_6 = arith.constant 0 : index
    %c0_7 = arith.constant 0 : index
    %26 = vector.load %arg4[%25, %c0_6, %c0_7] : memref<1x8x8xi8, #tpu.memory_space<vmem>>, vector<1x8x8xi8>
    %27 = vector.shape_cast %26 : vector<1x8x8xi8> to vector<8x8xi8>
    %28 = vector.shape_cast %24 : vector<8x8xi8> to vector<1x8x8xi8>
    tpu.vector_store %arg4[%25, %c0_6, %c0_7], %28 {strides = array<i32>} : memref<1x8x8xi8, #tpu.memory_space<vmem>>, vector<1x8x8xi8>,
    %c1_i32_8 = arith.constant 1 : i32
    return
  }
  func.func @transform_0(%arg0: i32) -> (i32, i32, i32) {
    %c0_i32 = arith.constant 0 : i32
    %c0_i32_0 = arith.constant 0 : i32
    %c0_i32_1 = arith.constant 0 : i32
    return %arg0, %c0_i32, %c0_i32_0 : i32, i32, i32
  }
  func.func @transform_1(%arg0: i32) -> (i32, i32, i32) {
    %c0_i32 = arith.constant 0 : i32
    %c0_i32_0 = arith.constant 0 : i32
    %c0_i32_1 = arith.constant 0 : i32
    return %arg0, %c0_i32, %c0_i32_0 : i32, i32, i32
  }
  func.func @transform_2(%arg0: i32) -> (i32, i32, i32) {
    %c0_i32 = arith.constant 0 : i32
    %c0_i32_0 = arith.constant 0 : i32
    %c0_i32_1 = arith.constant 0 : i32
    return %arg0, %c0_i32, %c0_i32_0 : i32, i32, i32
  }
  func.func @transform_3(%arg0: i32) -> (i32, i32, i32) {
    %c0_i32 = arith.constant 0 : i32
    %c0_i32_0 = arith.constant 0 : i32
    %c0_i32_1 = arith.constant 0 : i32
    return %arg0, %c0_i32, %c0_i32_0 : i32, i32, i32
  }
}

</mosaic_0001>

<llo_original>
// kernel: tpu_custom_call.1
$region0: #{tpu_custom_call.1}
  #allocation0 [shape = 'u32[]', space=smem, size = 0x4, offset = 0x4, fixed_abs, tag = 'smem constant byte address 0x4 - core index']
  #allocation1 [shape = 'u32[144,128]{1,0:T(1,128)}', space=vmem, size = 0x12000, scoped, tag = 'internal scratch']
  %s0 = inlined_call_operand.hbm [shape: f32[2,8,32], index: 0, kind: input, shape index: {}]
  %s1 = inlined_call_operand.vmem [shape: f32[2,1,8], index: 1, kind: input, shape index: {}]
  %s2 = inlined_call_operand.hbm [shape: f32[2,8,8], index: 2, kind: output, shape index: {0}]
  %s3 = inlined_call_operand.hbm [shape: s8[2,8,8], index: 3, kind: output, shape index: {1}]
  %4 = xla_tuple %s2, %s3
  %s5 = sld [smem:[#allocation0]]
  $region53: #{tpu_custom_call.1} parent=0
    _
  %s7 = ssub.s32 1, %s5
  %s8 = scalar_select 0, %s7, %s5
  $region1: #{tpu_custom_call.1} parent=0
    #allocation2 [shape = 'u8[8192]{0}', space=vmem, size = 0x2000, scoped, tag = 'input window, operand 0']
    #allocation3 [shape = 's32[2]{0}', space=sflag, size = 0x8, scoped, tag = 'scoped memory for tpu_custom_call.1']
    #allocation4 [shape = 's32[2]{0}', space=sflag, size = 0x8, scoped, tag = 'scoped memory for tpu_custom_call.1']
    #allocation5 [shape = 'u8[8192]{0}', space=vmem, size = 0x2000, scoped, tag = 'output window, operand 0']
    #allocation6 [shape = 'u8[2048]{0}', space=vmem, size = 0x800, scoped, tag = 'output window, operand 1']
    #allocation7 [shape = 's32[2]{0}', space=sflag, size = 0x8, scoped, tag = 'scoped memory for tpu_custom_call.1']
    %9 = vsyncpa [#allocation3], 0
    %s10 = scalar_lea.sflag [#allocation3], 1
    %11 = vsyncpa %s10, 0
    %12 = vsyncpa [#allocation4], 0
    %s13 = scalar_lea.sflag [#allocation4], 1
    %14 = vsyncpa %s13, 0
    %15 = vsyncpa [#allocation7], 0
    %s16 = scalar_lea.sflag [#allocation7], 1
    %17 = vsyncpa %s16, 0
    loop: start=0, step=1, limit=4
    $region2: #{tpu_custom_call.1} parent=1 // loop_pre_header
      _
    $region3: #{tpu_custom_call.1} parent=1 // loop_header
      %s19 = sphi 0, %s23
      %p20 = scmp.ge.s32.totalorder %s19, 4
      %s29 = sphi 0, %s31
      %s32 = sphi 0, %s29
      %s33 = sphi 0, %s32
      %s49 = sphi 0, %s33
      %s55 = sphi 0, %s57
      %s58 = sphi 0, %s55
      %s59 = sphi 0, %s58
      %s75 = sphi 0, %s59
      %s81 = sphi 0, %s83
      %s84 = sphi 0, %s81
      %s85 = sphi 0, %s84
      %s101 = sphi 0, %s85
      %s107 = sphi 0, %s109
      %s110 = sphi 0, %s107
      %s111 = sphi 0, %s110
      %s127 = sphi 0, %s111
    $region4: #{tpu_custom_call.1} parent=1 // loop_header_branch
      %22 = sbr.rel (%p20) target = $region8
    $region5: #{tpu_custom_call.1} parent=1 // loop_body
      %s24 = ssub.s32 %s19, 1
      %s25 = ssub.s32 %s19, 2
      %s26 = sadd.s32 %s19, 1
      %s27 = ssub.s32 %s19, %s26
      %p28 = scmp.eq.s32.totalorder %s27, 0
      %s30 = sadd.s32 %s29, 1
      %s31 = scalar_select %p28, %s29, %s30
      %p34 = pneg %p28
      %p35 = scmp.eq.s32.totalorder %s19, 1
      %p36 = por %p34, %p35
      %p37 = scmp.ne.s32.totalorder %s29, %s32
      %p38 = scmp.eq.s32.totalorder %s19, 0
      %p39 = por %p37, %p38
      %p40 = scmp.ne.s32.totalorder %s29, %s32
      %p41 = scmp.eq.s32.totalorder %s24, 1
      %p42 = por %p40, %p41
      %p43 = scmp.ne.s32.totalorder %s32, %s33
      %p44 = scmp.eq.s32.totalorder %s24, 0
      %p45 = por %p43, %p44
      %p46 = scmp.ne.s32.totalorder %s32, %s33
      %p47 = scmp.eq.s32.totalorder %s25, 1
      %p48 = por %p46, %p47
      %p50 = scmp.ne.s32.totalorder %s33, %s49
      %p51 = scmp.eq.s32.totalorder %s25, 0
      %p52 = por %p50, %p51
      %s53 = ssub.s32 %s19, %s26
      %p54 = scmp.eq.s32.totalorder %s53, 0
      %s56 = sadd.s32 %s55, 1
      %s57 = scalar_select %p54, %s55, %s56
      %p60 = pneg %p54
      %p61 = scmp.eq.s32.totalorder %s19, 1
      %p62 = por %p60, %p61
      %p63 = scmp.ne.s32.totalorder %s55, %s58
      %p64 = scmp.eq.s32.totalorder %s19, 0
      %p65 = por %p63, %p64
      %p66 = scmp.ne.s32.totalorder %s55, %s58
      %p67 = scmp.eq.s32.totalorder %s24, 1
      %p68 = por %p66, %p67
      %p69 = scmp.ne.s32.totalorder %s58, %s59
      %p70 = scmp.eq.s32.totalorder %s24, 0
      %p71 = por %p69, %p70
      %p72 = scmp.ne.s32.totalorder %s58, %s59
      %p73 = scmp.eq.s32.totalorder %s25, 1
      %p74 = por %p72, %p73
      %p76 = scmp.ne.s32.totalorder %s59, %s75
      %p77 = scmp.eq.s32.totalorder %s25, 0
      %p78 = por %p76, %p77
      %s79 = ssub.s32 %s19, %s26
      %p80 = scmp.eq.s32.totalorder %s79, 0
      %s82 = sadd.s32 %s81, 1
      %s83 = scalar_select %p80, %s81, %s82
      %p86 = pneg %p80
      %p87 = scmp.eq.s32.totalorder %s19, 1
      %p88 = por %p86, %p87
      %p89 = scmp.ne.s32.totalorder %s81, %s84
      %p90 = scmp.eq.s32.totalorder %s19, 0
      %p91 = por %p89, %p90
      %p92 = scmp.ne.s32.totalorder %s81, %s84
      %p93 = scmp.eq.s32.totalorder %s24, 1
      %p94 = por %p92, %p93
      %p95 = scmp.ne.s32.totalorder %s84, %s85
      %p96 = scmp.eq.s32.totalorder %s24, 0
      %p97 = por %p95, %p96
      %p98 = scmp.ne.s32.totalorder %s84, %s85
      %p99 = scmp.eq.s32.totalorder %s25, 1
      %p100 = por %p98, %p99
      %p102 = scmp.ne.s32.totalorder %s85, %s101
      %p103 = scmp.eq.s32.totalorder %s25, 0
      %p104 = por %p102, %p103
      %s105 = ssub.s32 %s19, %s26
      %p106 = scmp.eq.s32.totalorder %s105, 0
      %s108 = sadd.s32 %s107, 1
      %s109 = scalar_select %p106, %s107, %s108
      %p112 = pneg %p106
      %p113 = scmp.eq.s32.totalorder %s19, 1
      %p114 = por %p112, %p113
      %p115 = scmp.ne.s32.totalorder %s107, %s110
      %p116 = scmp.eq.s32.totalorder %s19, 0
      %p117 = por %p115, %p116
      %p118 = scmp.ne.s32.totalorder %s107, %s110
      %p119 = scmp.eq.s32.totalorder %s24, 1
      %p120 = por %p118, %p119
      %p121 = scmp.ne.s32.totalorder %s110, %s111
      %p122 = scmp.eq.s32.totalorder %s24, 0
      %p123 = por %p121, %p122
      %p124 = scmp.ne.s32.totalorder %s110, %s111
      %p125 = scmp.eq.s32.totalorder %s25, 1
      %p126 = por %p124, %p125
      %p128 = scmp.ne.s32.totalorder %s111, %s127
      %p129 = scmp.eq.s32.totalorder %s25, 0
      %p130 = por %p128, %p129
      %p131 = scmp.le.s32.totalorder 1, %s19
      %p132 = scmp.lt.s32.totalorder %s19, 3
      %p133 = pnand %p131, %p132
      %p134 = pneg %p133
      // Predicated region
      $region9: #{tpu_custom_call.1} parent=5 // pred_check
        _
      $region10: #{tpu_custom_call.1} parent=5 // pred_check_branch
        %136 = sbr.rel (%p133) target = $region12
      $region11: #{tpu_custom_call.1} parent=5 // pred_region
        %s137 = ssub.s32 %s19, 1
      $region12: #{tpu_custom_call.1} parent=5 // pred_fallthru
        _
      %p138 = scmp.lt.s32.totalorder %s19, 2
      // Predicated region
      $region13: #{tpu_custom_call.1} parent=5 // pred_check
        %p139 = pneg %p138
      $region14: #{tpu_custom_call.1} parent=5 // pred_check_branch
        %141 = sbr.rel (%p139) target = $region16
      $region15: #{tpu_custom_call.1} parent=5 // pred_region
        // Predicated region
        $region17: #{tpu_custom_call.1} parent=15 // pred_check
          %p142 = pneg %p39
        $region18: #{tpu_custom_call.1} parent=15 // pred_check_branch
          %144 = sbr.rel (%p142) target = $region20
        $region19: #{tpu_custom_call.1} parent=15 // pred_region
          %s145 = sand.u32 %s29, 1
          %s146 = scalar_lea.sflag [#allocation3], %s145
          %s147 = sand.u32 %s29, 1
          %s148 = smul.addr %s147, 8
          %s149 = scalar_lea.vmem [#allocation2], %s148
          %s151 = ssub.s32 128, 128
          %152 = vsyncadd %s146, %s151
          %s153 = smul.addr %s19, 128
          %s154 = scalar_lea.hbm %s0, %s153
          %s156 = sshll.u32 %s149, 4
          %s157 = int_to_ptr.vmem [resolvable:$true] %s156
          %159 = dma.hbm_to_vmem [thread:$0]  %s154, 128, %s157, %s146
        $region20: #{tpu_custom_call.1} parent=15 // pred_fallthru
          _
        // Predicated region
        $region21: #{tpu_custom_call.1} parent=15 // pred_check
          %p160 = pneg %p65
        $region22: #{tpu_custom_call.1} parent=15 // pred_check_branch
          %162 = sbr.rel (%p160) target = $region24
        $region23: #{tpu_custom_call.1} parent=15 // pred_region
          %p163 = scmp.lt.s32.totalorder %s19, 1
          %s164 = scalar_select %p163, %s19, 1
          %s165 = scalar_lea.vmem %s1, %s164
        $region24: #{tpu_custom_call.1} parent=15 // pred_fallthru
          _
      $region16: #{tpu_custom_call.1} parent=5 // pred_fallthru
        _
      %p166 = scmp.le.s32.totalorder 1, %s19
      %p167 = scmp.lt.s32.totalorder %s19, 3
      %p168 = pnand %p166, %p167
      %p169 = pneg %p168
      // Predicated region
      $region25: #{tpu_custom_call.1} parent=5 // pred_check
        _
      $region26: #{tpu_custom_call.1} parent=5 // pred_check_branch
        %171 = sbr.rel (%p168) target = $region28
      $region27: #{tpu_custom_call.1} parent=5 // pred_region
        %s172 = ssub.s32 %s19, 1
        %s173 = sand.u32 %s32, 1
        %s174 = scalar_lea.sflag [#allocation3], %s173
        %s175 = sand.u32 %s32, 1
        %s176 = smul.addr %s175, 8
        %s177 = scalar_lea.vmem [#allocation2], %s176
        // Predicated region
        $region29: #{tpu_custom_call.1} parent=27 // pred_check
          %p178 = pneg %p45
        $region30: #{tpu_custom_call.1} parent=27 // pred_check_branch
          %180 = sbr.rel (%p178) target = $region32
        $region31: #{tpu_custom_call.1} parent=27 // pred_region
          %181 = dma.done %s174, 128
        $region32: #{tpu_custom_call.1} parent=27 // pred_fallthru
          _
        %s182 = sand.u32 %s32, 1
        %s183 = scalar_lea.sflag [#allocation3], %s182
        %s184 = sand.u32 %s32, 1
        %s185 = smul.addr %s184, 8
        %s186 = scalar_lea.vmem [#allocation2], %s185
        %p187 = pneg %p45
        %p188 = pneg %p42
        %p189 = scmp.lt.s32.totalorder %s24, 1
        %s190 = scalar_select %p189, %s24, 1
        %s191 = scalar_lea.vmem %s1, %s190
        %p192 = pneg %p71
        %p193 = pneg %p68
        %p194 = pneg %p97
        %p195 = pneg %p94
        %s196 = sand.u32 %s84, 1
        %s197 = scalar_lea.sflag [#allocation4], %s196
        %s198 = sand.u32 %s84, 1
        %s199 = smul.addr %s198, 8
        %s200 = scalar_lea.vmem [#allocation5], %s199
        %p201 = pneg %p123
        %p202 = pneg %p120
        %s203 = sand.u32 %s110, 1
        %s204 = scalar_lea.sflag [#allocation7], %s203
        %s205 = sand.u32 %s110, 1
        %s206 = smul.addr %s205, 2
        %s207 = scalar_lea.vmem [#allocation6], %s206
        %p208 = scmp.lt.s32.totalorder %s24, 1
        %s209 = scalar_select %p208, %s24, 1
        %s210 = scalar_lea.vmem %s1, %s209
        %v211 = vld [vmem:[%s177] sm:$0xff]
        %v213 = vcombine.high %v211, %v211
        %v215 = vunpack.c.l.s4 1966171168
        %v216 = vunpack.c.0.s8 %v215
        %v217 = vlaneseq
        %v218 = vshrl.u32 %v217, 7
        %v219 = vsub.s32 %v216, %v218
        %v220 = vrot.slane %v211, %v219
        %v222 = vunpack.c.l.s4 1966171168
        %v223 = vunpack.c.0.s8 %v222
        %v224 = vlaneseq
        %v225 = vshrl.u32 %v224, 7
        %v226 = vsub.s32 %v223, %v225
        %v227 = vrot.slane %v213, %v226
        %v228 = vcombine.high %v220, %v220
        %v229 = vcombine.high %v227, %v227
        %v231 = vunpack.c.l.s4 1966171168
        %v232 = vunpack.c.0.s8 %v231
        %v233 = vlaneseq
        %v234 = vshrl.u32 %v233, 7
        %v235 = vsub.s32 %v232, %v234
        %v236 = vrot.slane %v220, %v235
        %v238 = vunpack.c.l.s4 1966171168
        %v239 = vunpack.c.0.s8 %v238
        %v240 = vlaneseq
        %v241 = vshrl.u32 %v240, 7
        %v242 = vsub.s32 %v239, %v241
        %v243 = vrot.slane %v227, %v242
        %v245 = vunpack.c.l.s4 1966171168
        %v246 = vunpack.c.0.s8 %v245
        %v247 = vlaneseq
        %v248 = vshrl.u32 %v247, 7
        %v249 = vsub.s32 %v246, %v248
        %v250 = vrot.slane %v228, %v249
        %v252 = vunpack.c.l.s4 1966171168
        %v253 = vunpack.c.0.s8 %v252
        %v254 = vlaneseq
        %v255 = vshrl.u32 %v254, 7
        %v256 = vsub.s32 %v253, %v255
        %v257 = vrot.slane %v229, %v256
        %v258 = vcombine.high %v236, %v236
        %v259 = vcombine.high %v243, %v243
        %v260 = vcombine.high %v250, %v250
        %v261 = vcombine.high %v257, %v257
        %v262 = vlaneseq
        %v263 = vshrl.u32 %v262, 7
        %v264 = vsub.s32 0, %v263
        %v265 = vrot.slane %v236, %v264
        %v266 = vlaneseq
        %v267 = vshrl.u32 %v266, 7
        %v268 = vsub.s32 0, %v267
        %v269 = vrot.slane %v250, %v268
        %v270 = vlaneseq
        %v271 = vshrl.u32 %v270, 7
        %v272 = vsub.s32 0, %v271
        %v273 = vrot.slane %v258, %v272
        %v274 = vlaneseq
        %v275 = vshrl.u32 %v274, 7
        %v276 = vsub.s32 0, %v275
        %v277 = vrot.slane %v260, %v276
        %v278 = vlaneseq
        %v279 = vshrl.u32 %v278, 7
        %v280 = vsub.s32 0, %v279
        %v281 = vrot.slane %v243, %v280
        %v282 = vlaneseq
        %v283 = vshrl.u32 %v282, 7
        %v284 = vsub.s32 0, %v283
        %v285 = vrot.slane %v257, %v284
        %v286 = vlaneseq
        %v287 = vshrl.u32 %v286, 7
        %v288 = vsub.s32 0, %v287
        %v289 = vrot.slane %v259, %v288
        %v290 = vlaneseq
        %v291 = vshrl.u32 %v290, 7
        %v292 = vsub.s32 0, %v291
        %v293 = vrot.slane %v261, %v292
        %v302 = vsub.f32 %v265, %v211
        %v303 = vsub.f32 %v269, %v211
        %v304 = vsub.f32 %v273, %v211
        %v305 = vsub.f32 %v277, %v211
        %v306 = vsub.f32 %v281, %v211
        %v307 = vsub.f32 %v285, %v211
        %v308 = vsub.f32 %v289, %v211
        %v309 = vsub.f32 %v293, %v211
        %v310 = vmul.f32 %v302, %v302
        %v311 = vmul.f32 %v303, %v303
        %v312 = vmul.f32 %v304, %v304
        %v313 = vmul.f32 %v305, %v305
        %v314 = vmul.f32 %v306, %v306
        %v315 = vmul.f32 %v307, %v307
        %v316 = vmul.f32 %v308, %v308
        %v317 = vmul.f32 %v309, %v309
        %vm318 = vcmask 261120
        %v319 = vsel %vm318, %v310, 0.0
        %320 = vadd.xlane.f32.xlu0 %v319
        %v321 = vpop.xlane.xlu0 %320
        %v322 = vsel %vm318, %v311, 0.0
        %323 = vadd.xlane.f32.xlu0 %v322
        %v324 = vpop.xlane.xlu0 %323
        %v325 = vsel %vm318, %v312, 0.0
        %326 = vadd.xlane.f32.xlu0 %v325
        %v327 = vpop.xlane.xlu0 %326
        %v328 = vsel %vm318, %v313, 0.0
        %329 = vadd.xlane.f32.xlu0 %v328
        %v330 = vpop.xlane.xlu0 %329
        %v331 = vsel %vm318, %v314, 0.0
        %332 = vadd.xlane.f32.xlu0 %v331
        %v333 = vpop.xlane.xlu0 %332
        %v334 = vsel %vm318, %v315, 0.0
        %335 = vadd.xlane.f32.xlu0 %v334
        %v336 = vpop.xlane.xlu0 %335
        %v337 = vsel %vm318, %v316, 0.0
        %338 = vadd.xlane.f32.xlu0 %v337
        %v339 = vpop.xlane.xlu0 %338
        %v340 = vsel %vm318, %v317, 0.0
        %341 = vadd.xlane.f32.xlu0 %v340
        %v342 = vpop.xlane.xlu0 %341
        %v343 = vrsqrt.pop %v321
        %v344 = vmul.f32 %v321, %v343
        %vm345 = vcmp.eq.f32.partialorder %v321, inf
        %v346 = vsel %vm345, %v321, %v344
        %vm347 = vcmp.eq.f32.partialorder %v321, 0.0
        %v348 = vand.u32 %v321, 2147483648
        %v349 = vsel %vm347, %v348, %v346
        %v350 = vrsqrt.pop %v324
        %v351 = vmul.f32 %v324, %v350
        %vm352 = vcmp.eq.f32.partialorder %v324, inf
        %v353 = vsel %vm352, %v324, %v351
        %vm354 = vcmp.eq.f32.partialorder %v324, 0.0
        %v355 = vand.u32 %v324, 2147483648
        %v356 = vsel %vm354, %v355, %v353
        %v357 = vrsqrt.pop %v327
        %v358 = vmul.f32 %v327, %v357
        %vm359 = vcmp.eq.f32.partialorder %v327, inf
        %v360 = vsel %vm359, %v327, %v358
        %vm361 = vcmp.eq.f32.partialorder %v327, 0.0
        %v362 = vand.u32 %v327, 2147483648
        %v363 = vsel %vm361, %v362, %v360
        %v364 = vrsqrt.pop %v330
        %v365 = vmul.f32 %v330, %v364
        %vm366 = vcmp.eq.f32.partialorder %v330, inf
        %v367 = vsel %vm366, %v330, %v365
        %vm368 = vcmp.eq.f32.partialorder %v330, 0.0
        %v369 = vand.u32 %v330, 2147483648
        %v370 = vsel %vm368, %v369, %v367
        %v371 = vrsqrt.pop %v333
        %v372 = vmul.f32 %v333, %v371
        %vm373 = vcmp.eq.f32.partialorder %v333, inf
        %v374 = vsel %vm373, %v333, %v372
        %vm375 = vcmp.eq.f32.partialorder %v333, 0.0
        %v376 = vand.u32 %v333, 2147483648
        %v377 = vsel %vm375, %v376, %v374
        %v378 = vrsqrt.pop %v336
        %v379 = vmul.f32 %v336, %v378
        %vm380 = vcmp.eq.f32.partialorder %v336, inf
        %v381 = vsel %vm380, %v336, %v379
        %vm382 = vcmp.eq.f32.partialorder %v336, 0.0
        %v383 = vand.u32 %v336, 2147483648
        %v384 = vsel %vm382, %v383, %v381
        %v385 = vrsqrt.pop %v339
        %v386 = vmul.f32 %v339, %v385
        %vm387 = vcmp.eq.f32.partialorder %v339, inf
        %v388 = vsel %vm387, %v339, %v386
        %vm389 = vcmp.eq.f32.partialorder %v339, 0.0
        %v390 = vand.u32 %v339, 2147483648
        %v391 = vsel %vm389, %v390, %v388
        %v392 = vrsqrt.pop %v342
        %v393 = vmul.f32 %v342, %v392
        %vm394 = vcmp.eq.f32.partialorder %v342, inf
        %v395 = vsel %vm394, %v342, %v393
        %vm396 = vcmp.eq.f32.partialorder %v342, 0.0
        %v397 = vand.u32 %v342, 2147483648
        %v398 = vsel %vm396, %v397, %v395
        %v399 = vld [vmem:[%s210] sm:$0x1]
        %400 = vxpose.xlu0.b32.start [1/16] %v399, 128
        %401 = vxpose.xlu0.b32.cont [2/16] 0.0, 128
        %402 = vxpose.xlu0.b32.cont [3/16] 0.0, 128
        %403 = vxpose.xlu0.b32.cont [4/16] 0.0, 128
        %404 = vxpose.xlu0.b32.cont [5/16] 0.0, 128
        %405 = vxpose.xlu0.b32.cont [6/16] 0.0, 128
        %406 = vxpose.xlu0.b32.cont [7/16] 0.0, 128
        %407 = vxpose.xlu0.b32.cont [8/16] 0.0, 128
        %408 = vxpose.xlu0.b32.cont [9/16] 0.0, 128
        %409 = vxpose.xlu0.b32.cont [10/16] 0.0, 128
        %410 = vxpose.xlu0.b32.cont [11/16] 0.0, 128
        %411 = vxpose.xlu0.b32.cont [12/16] 0.0, 128
        %412 = vxpose.xlu0.b32.cont [13/16] 0.0, 128
        %413 = vxpose.xlu0.b32.cont [14/16] 0.0, 128
        %414 = vxpose.xlu0.b32.cont [15/16] 0.0, 128
        %415 = vxpose.xlu0.b32.end [16/16] 0.0, 128
        %v416 = vpop.trf.xlu0
        %v417 = vpop.trf.xlu0
        %v418 = vpop.trf.xlu0
        %v419 = vpop.trf.xlu0
        %v420 = vpop.trf.xlu0
        %v421 = vpop.trf.xlu0
        %v422 = vpop.trf.xlu0
        %v423 = vpop.trf.xlu0
        %v424 = vpop.trf.xlu0
        %v425 = vpop.trf.xlu0
        %v426 = vpop.trf.xlu0
        %v427 = vpop.trf.xlu0
        %v428 = vpop.trf.xlu0
        %v429 = vpop.trf.xlu0
        %v430 = vpop.trf.xlu0
        %v431 = vpop.trf.xlu0
        %433 = vset.pattern.permute.xlu0 0
        %434 = vperm.xlu0 %433, %v416
        %v435 = vpop.permute.xlu0 %434
        %v438 = vlaneseq
        %v439 = vshrl.u32 %v438, 7
        %v440 = vsub.s32 0, %v439
        %v441 = vrot.slane %v399, %v440
        %v443 = vmul.f32 %v435, %v441
        %v452 = vlaneseq
        %v453 = vand.u32 %v452, 127
        %v454 = vlaneseq
        %v455 = vshrl.u32 %v454, 7
        %v456 = vsub.s32 %v453, %v455
        %v457 = vrot.slane %v349, %v456
        %v458 = vlaneseq
        %v459 = vshrl.u32 %v458, 7
        %v460 = vsub.s32 %v453, %v459
        %v461 = vrot.slane %v356, %v460
        %v462 = vlaneseq
        %v463 = vshrl.u32 %v462, 7
        %v464 = vsub.s32 %v453, %v463
        %v465 = vrot.slane %v363, %v464
        %v466 = vlaneseq
        %v467 = vshrl.u32 %v466, 7
        %v468 = vsub.s32 %v453, %v467
        %v469 = vrot.slane %v370, %v468
        %v470 = vlaneseq
        %v471 = vshrl.u32 %v470, 7
        %v472 = vsub.s32 %v453, %v471
        %v473 = vrot.slane %v377, %v472
        %v474 = vlaneseq
        %v475 = vshrl.u32 %v474, 7
        %v476 = vsub.s32 %v453, %v475
        %v477 = vrot.slane %v384, %v476
        %v478 = vlaneseq
        %v479 = vshrl.u32 %v478, 7
        %v480 = vsub.s32 %v453, %v479
        %v481 = vrot.slane %v391, %v480
        %v482 = vlaneseq
        %v483 = vshrl.u32 %v482, 7
        %v484 = vsub.s32 %v453, %v483
        %v485 = vrot.slane %v398, %v484
        %vm486 = vcmask 1041409
        %v487 = vsel %vm486, %v461, %v457
        %vm488 = vcmask 1042434
        %v489 = vsel %vm488, %v465, %v487
        %vm490 = vcmask 1043459
        %v491 = vsel %vm490, %v469, %v489
        %vm492 = vcmask 1044484
        %v493 = vsel %vm492, %v473, %v491
        %vm494 = vcmask 1045509
        %v495 = vsel %vm494, %v477, %v493
        %vm496 = vcmask 1046534
        %v497 = vsel %vm496, %v481, %v495
        %vm498 = vcmask 1047559
        %v499 = vsel %vm498, %v485, %v497
        %vm501 = vcmask 64512
        %502 = vst.msk [vmem:[%s200] sm:$0xff] %vm501, %v499
        %v503 = vtrunc.f32 %v443
        %v504 = vpack.c.f32.eXmY %v503, %v503, 312
        %v508 = vpack.c.b8 %v504, %v504
        %vm510 = vcmask 58368
        %511 = vst.msk [vmem:[%s207] sm:$0x3] %vm510, %v508
        %s512 = sand.u32 %s84, 1
        %s513 = scalar_lea.sflag [#allocation4], %s512
        %s514 = sand.u32 %s84, 1
        %s515 = smul.addr %s514, 8
        %s516 = scalar_lea.vmem [#allocation5], %s515
        %s517 = sand.u32 %s110, 1
        %s518 = scalar_lea.sflag [#allocation7], %s517
        %s519 = sand.u32 %s110, 1
        %s520 = smul.addr %s519, 2
        %s521 = scalar_lea.vmem [#allocation6], %s520
        // Predicated region
        $region33: #{tpu_custom_call.1} parent=27 // pred_check
          %p522 = pneg %p94
        $region34: #{tpu_custom_call.1} parent=27 // pred_check_branch
          %524 = sbr.rel (%p522) target = $region36
        $region35: #{tpu_custom_call.1} parent=27 // pred_region
          %s526 = ssub.s32 128, 128
          %527 = vsyncadd %s513, %s526
          %s528 = smul.addr %s24, 128
          %s529 = scalar_lea.hbm %s2, %s528
          %s531 = sshll.u32 %s516, 4
          %s532 = int_to_ptr.vmem [resolvable:$true] %s531
          %534 = dma.vmem_to_hbm [thread:$0]  %s532, 128, %s529, %s513
        $region36: #{tpu_custom_call.1} parent=27 // pred_fallthru
          _
        // Predicated region
        $region37: #{tpu_custom_call.1} parent=27 // pred_check
          %p535 = pneg %p120
        $region38: #{tpu_custom_call.1} parent=27 // pred_check_branch
          %537 = sbr.rel (%p535) target = $region40
        $region39: #{tpu_custom_call.1} parent=27 // pred_region
          %s539 = ssub.s32 32, 32
          %540 = vsyncadd %s518, %s539
          %s541 = smul.addr %s24, 32
          %s542 = scalar_lea.hbm %s3, %s541
          %s544 = sshll.u32 %s521, 4
          %s545 = int_to_ptr.vmem [resolvable:$true] %s544
          %547 = dma.vmem_to_hbm [thread:$0]  %s545, 32, %s542, %s518
        $region40: #{tpu_custom_call.1} parent=27 // pred_fallthru
          _
      $region28: #{tpu_custom_call.1} parent=5 // pred_fallthru
        _
      %p548 = scmp.le.s32.totalorder 2, %s19
      // Predicated region
      $region41: #{tpu_custom_call.1} parent=5 // pred_check
        %p549 = pneg %p548
      $region42: #{tpu_custom_call.1} parent=5 // pred_check_branch
        %551 = sbr.rel (%p549) target = $region44
      $region43: #{tpu_custom_call.1} parent=5 // pred_region
        %s552 = ssub.s32 %s19, 2
        // Predicated region
        $region45: #{tpu_custom_call.1} parent=43 // pred_check
          %p553 = pneg %p100
        $region46: #{tpu_custom_call.1} parent=43 // pred_check_branch
          %555 = sbr.rel (%p553) target = $region48
        $region47: #{tpu_custom_call.1} parent=43 // pred_region
          %s556 = sand.u32 %s85, 1
          %s557 = scalar_lea.sflag [#allocation4], %s556
          %s558 = sand.u32 %s85, 1
          %s559 = smul.addr %s558, 8
          %s560 = scalar_lea.vmem [#allocation5], %s559
          %561 = dma.done %s557, 128
        $region48: #{tpu_custom_call.1} parent=43 // pred_fallthru
          _
        // Predicated region
        $region49: #{tpu_custom_call.1} parent=43 // pred_check
          %p562 = pneg %p126
        $region50: #{tpu_custom_call.1} parent=43 // pred_check_branch
          %564 = sbr.rel (%p562) target = $region52
        $region51: #{tpu_custom_call.1} parent=43 // pred_region
          %s565 = sand.u32 %s111, 1
          %s566 = scalar_lea.sflag [#allocation7], %s565
          %s567 = sand.u32 %s111, 1
          %s568 = smul.addr %s567, 2
          %s569 = scalar_lea.vmem [#allocation6], %s568
          %570 = dma.done %s566, 32
        $region52: #{tpu_custom_call.1} parent=43 // pred_fallthru
          _
      $region44: #{tpu_custom_call.1} parent=5 // pred_fallthru
        _
    $region6: #{tpu_custom_call.1} parent=1 // loop_footer
      %s23 = sadd.s32 1, %s19
    $region7: #{tpu_custom_call.1} parent=1 // loop_footer_branch
      %18 = sbr.rel target = $region3
    $region8: #{tpu_custom_call.1} parent=1 // loop_exit
      _
    %571 = vsyncpa [#allocation3], 1
    %s572 = scalar_lea.sflag [#allocation3], 1
    %573 = vsyncpa %s572, 1
    %574 = vsyncpa [#allocation4], 1
    %s575 = scalar_lea.sflag [#allocation4], 1
    %576 = vsyncpa %s575, 1
    %577 = vsyncpa [#allocation7], 1
    %s578 = scalar_lea.sflag [#allocation7], 1
    %579 = vsyncpa %s578, 1

</llo_original>
